<compile_context>
chip_gen: v5e
topology: v5e:2x2
jax: 0.10.0
libtpu: 0.0.40
codegen_flags: <defaults>
</compile_context>

<pallas_src>
import functools

import jax
import jax.numpy as jnp
from jax.experimental import pallas as pl
from jax.experimental.pallas import tpu as pltpu

_LANE = 128  # lane tile (last dim)


def _round_up(v, m):
    return ((v + m - 1) // m) * m


def _pick_tiles(n_nodes):
    """Row / reduction tile sizes and the padded node count.

    - Row tile TM = 128 while the graph is small (keeps >= 2 row blocks so the
      'parallel' axis can be split across 2 TensorCores on v7x); 256 for big
      graphs to fill the 256x256 MXU on v6e/v7x.
    - Reduction tile TK collapses the K loop entirely while the padded row
      band fits comfortably in VMEM (removes per-step pipeline overhead at toy
      sizes), else caps at 512 to amortize per-step overhead on v5e.
    """
    tm = 128 if n_nodes <= 512 else 256
    n_pad = _round_up(n_nodes, tm)
    if n_pad <= 2048:
        tk = n_pad                      # single K step
    else:
        tk = 512
        n_pad = _round_up(n_pad, tk)    # keep n_pad divisible by both tiles
    return tm, tk, n_pad


def _gcn_kernel(a_ref, xw_ref, b1_ref, h_ref, acc_ref):
    """One (i, k) grid step of H = relu(A @ XW + b1), bf16 MXU / f32 acc."""
    k = pl.program_id(1)

    @pl.when(k == 0)
    def _():
        # Fold the bias into the accumulator init (finalize becomes relu+cast).
        acc_ref[...] = jnp.broadcast_to(b1_ref[...], acc_ref.shape)

    # Single MXU push per step: edge-weighted aggregation of the precomputed
    # feature transform (A[src, dst] row-aggregation convention, as before).
    acc_ref[...] += jnp.dot(a_ref[...], xw_ref[...],
                            preferred_element_type=jnp.float32)

    @pl.when(k == pl.num_programs(1) - 1)
    def _():
        h_ref[...] = jnp.maximum(acc_ref[...], 0.0).astype(h_ref.dtype)


@functools.partial(jax.jit, static_argnames=("num_graphs", "pooltype"))
def my_model_forward(x, edge_index, edge_weight, batch, w1, b1, w2, b2,
                     *, num_graphs, pooltype="mean"):
    """JAX/Pallas equivalent of MyModel.forward (GCN + pool + FC head)."""
    n_nodes, _ = x.shape
    hid = w1.shape[1]
    tm, tk, n_pad = _pick_tiles(n_nodes)
    h_pad = _round_up(hid, _LANE)

    # ---- glue: densify graph structure directly at padded size (one scatter
    # for edges + one diagonal scatter for self loops + a single bf16 cast; no
    # separate pad / eye materializations).
    # TODO(synk): for large/sparse graphs replace the dense O(N^2) adjacency
    # with a CSR/edge-list aggregation kernel (PrefetchScalarGridSpec
    # scalar-prefetched row offsets/indices driving the gather) and fuse the
    # pooling reduction so H never round-trips HBM.
    adj = jnp.zeros((n_pad, n_pad), jnp.float32)
    adj = adj.at[edge_index[0], edge_index[1]].add(edge_weight)
    diag = jnp.arange(n_nodes)
    adj = adj.at[diag, diag].add(1.0)                          # self loops
    adj_b = adj.astype(jnp.bfloat16)

    # Hoisted feature transform: computed once (tiny: N x F_in x hid), padded
    # and cast to bf16 in one step; fed to the kernel in place of X + W1.
    xw = jnp.dot(x, w1, preferred_element_type=jnp.float32)    # (N, hid)
    xw_b = jnp.pad(xw, ((0, n_pad - n_nodes), (0, h_pad - hid))
                   ).astype(jnp.bfloat16)                      # (n_pad, h_pad)
    b1_p = jnp.pad(b1.reshape(1, -1), ((0, 0), (0, h_pad - hid)))

    grid = (n_pad // tm, n_pad // tk)
    flops = 2 * n_pad * n_pad * h_pad
    bytes_accessed = (adj_b.size * 2 + xw_b.size * 2 + b1_p.size * 4
                      + n_pad * h_pad * 2)

    h = pl.pallas_call(
        _gcn_kernel,
        out_shape=jax.ShapeDtypeStruct((n_pad, h_pad), jnp.bfloat16),
        grid_spec=pltpu.PrefetchScalarGridSpec(
            num_scalar_prefetch=0,
            grid=grid,
            in_specs=[
                pl.BlockSpec((tm, tk), lambda i, k: (i, k)),       # A tile
                pl.BlockSpec((tk, h_pad), lambda i, k: (k, 0)),    # XW tile
                pl.BlockSpec((1, h_pad), lambda i, k: (0, 0)),     # b1
            ],
            out_specs=pl.BlockSpec((tm, h_pad), lambda i, k: (i, 0)),
            scratch_shapes=[pltpu.VMEM((tm, h_pad), jnp.float32)]),
        compiler_params=pltpu.CompilerParams(
            dimension_semantics=("parallel", "arbitrary"),
            vmem_limit_bytes=32 * 1024 * 1024),
        cost_estimate=pl.CostEstimate(flops=flops, transcendentals=0,
                                      bytes_accessed=bytes_accessed),
    )(adj_b, xw_b, b1_p)

    # ---- tiny tail: graph pooling + FC head (B, C are vreg-granularity; keep
    # them in XLA so the kernel output stays a lane-dense bf16 (TM, H_pad)
    # tile that is read back at half the HBM traffic of f32).
    batch_pad = jnp.pad(batch, (0, n_pad - n_nodes), constant_values=-1)
    pool = (batch_pad[None, :] == jnp.arange(num_graphs)[:, None]).astype(
        jnp.float32)                                           # (B, n_pad)
    if pooltype == "mean":
        pool = pool / jnp.maximum(pool.sum(axis=1, keepdims=True), 1.0)

    pooled = jnp.dot(pool.astype(jnp.bfloat16), h,
                     preferred_element_type=jnp.float32)       # (B, h_pad)
    w2_p = jnp.pad(w2, ((0, h_pad - hid), (0, 0)))
    y = pooled @ w2_p + b2.reshape(1, -1)                      # (B, C)
    # FC also produces softmax(y); MyModel.forward returns only y.
    return y


if __name__ == "__main__":
    key = jax.random.PRNGKey(0)
    k_x, k_w1, k_w2, k_ew = jax.random.split(key, 4)

    # Small synthetic graph batch: 256 nodes, 8 input feats, 32 hidden,
    # 2 graphs, 4 classes (256 nodes -> grid (2, 1): two parallel row tiles,
    # reduction axis collapsed to one step).
    N, F_IN, HID, B, C = 256, 8, 32, 2, 4

    x = jax.random.normal(k_x, (N, F_IN), jnp.float32)

    # ring edges within each half (graph 0 = first half, graph 1 = second half)
    half = N // 2
    src = jnp.arange(N, dtype=jnp.int32)
    dst = jnp.where(src < half,
                    (src + 1) % half,
                    (src + 1 - half) % half + half).astype(jnp.int32)
    edge_index = jnp.stack([src, dst], axis=0)                 # (2, E)
    edge_weight = jax.random.uniform(k_ew, (N,), jnp.float32, 0.5, 1.5)
    batch = (jnp.arange(N) >= half).astype(jnp.int32)          # (N,)

    w1 = jax.random.normal(k_w1, (F_IN, HID), jnp.float32) * 0.1
    b1 = jnp.zeros((1, HID), jnp.float32)
    w2 = jax.random.normal(k_w2, (HID, C), jnp.float32) * 0.1
    b2 = jnp.zeros((1, C), jnp.float32)

    y = my_model_forward(x, edge_index, edge_weight, batch, w1, b1, w2, b2,
                         num_graphs=B, pooltype="mean")
    jax.block_until_ready(y)

    # Pure-JAX reference with the same bf16 operand rounding as the kernel:
    # XW computed in f32 then rounded to bf16, A rounded to bf16, H rounded to
    # bf16 before pooling.
    adj_r = jnp.zeros((N, N)).at[edge_index[0], edge_index[1]].add(edge_weight)
    adj_r = adj_r + jnp.eye(N)
    adj_r = adj_r.astype(jnp.bfloat16).astype(jnp.float32)
    xw_r = (x @ w1).astype(jnp.bfloat16).astype(jnp.float32)
    h_r = jnp.maximum(adj_r @ xw_r + b1, 0.0)
    h_r = h_r.astype(jnp.bfloat16).astype(jnp.float32)
    pool_r = (batch[None, :] == jnp.arange(B)[:, None]).astype(jnp.float32)
    pool_r = pool_r / jnp.maximum(pool_r.sum(1, keepdims=True), 1.0)
    y_ref = pool_r @ h_r @ w2 + b2

    assert y.shape == (B, C)
    assert jnp.allclose(y, y_ref, atol=1e-2, rtol=1e-2), (
        float(jnp.max(jnp.abs(y - y_ref))))

    print("KERNEL_OK")
</pallas_src>

<mosaic_0001>
module attributes {stable_mosaic.version = 11 : i64} {
  func.func @_gcn_kernel(%arg0: i32, %arg1: i32, %arg2: memref<128x256xbf16, #tpu.memory_space<vmem>>, %arg3: memref<256x128xbf16, #tpu.memory_space<vmem>>, %arg4: memref<1x128xf32, #tpu.memory_space<vmem>>, %arg5: memref<128x128xbf16, #tpu.memory_space<vmem>>, %arg6: memref<128x128xf32, #tpu.memory_space<vmem>>) attributes {dimension_semantics = [#tpu.dimension_semantics<parallel>, #tpu.dimension_semantics<arbitrary>], iteration_bounds = array<i64: 2, 1>, scalar_prefetch = 0 : i64, scratch_operands = 1 : i64, tpu.core_type = #tpu.core_type<tc>, window_params = [{transform_indices = @transform_0, window_bounds = array<i64: 128, 256>}, {transform_indices = @transform_1, window_bounds = array<i64: 256, 128>}, {pipeline_mode = #tpu.pipeline_mode<synchronous>, transform_indices = @transform_2, window_bounds = array<i64: 1, 128>}, {transform_indices = @transform_3, window_bounds = array<i64: 128, 128>}]} {
    %c0_i32 = arith.constant 0 : i32
    %0 = arith.cmpi eq, %arg1, %c0_i32 : i32
    %1 = arith.extui %0 : i1 to i32
    %c0_i32_0 = arith.constant 0 : i32
    %2 = arith.cmpi ne, %1, %c0_i32_0 : i32
    scf.if %2 {
      %c0_10 = arith.constant 0 : index
      %c0_11 = arith.constant 0 : index
      %12 = vector.load %arg4[%c0_10, %c0_11] : memref<1x128xf32, #tpu.memory_space<vmem>>, vector<1x128xf32>
      %13 = vector.shape_cast %12 : vector<1x128xf32> to vector<1x128xf32>
      %14 = vector.broadcast %13 : vector<1x128xf32> to vector<128x128xf32>
      %c0_12 = arith.constant 0 : index
      %c0_13 = arith.constant 0 : index
      %15 = vector.load %arg6[%c0_12, %c0_13] : memref<128x128xf32, #tpu.memory_space<vmem>>, vector<128x128xf32>
      tpu.vector_store %arg6[%c0_12, %c0_13], %14 {strides = array<i32>} : memref<128x128xf32, #tpu.memory_space<vmem>>, vector<128x128xf32>,
    } else {
    }
    %c0 = arith.constant 0 : index
    %c0_1 = arith.constant 0 : index
    %3 = vector.load %arg6[%c0, %c0_1] : memref<128x128xf32, #tpu.memory_space<vmem>>, vector<128x128xf32>
    %c0_2 = arith.constant 0 : index
    %c0_3 = arith.constant 0 : index
    %4 = vector.load %arg2[%c0_2, %c0_3] : memref<128x256xbf16, #tpu.memory_space<vmem>>, vector<128x256xbf16>
    %c0_4 = arith.constant 0 : index
    %c0_5 = arith.constant 0 : index
    %5 = vector.load %arg3[%c0_4, %c0_5] : memref<256x128xbf16, #tpu.memory_space<vmem>>, vector<256x128xbf16>
    %cst = arith.constant dense<0.000000e+00> : vector<128x128xf32>
    %6 = tpu.matmul %4, %5, %cst {dimension_numbers = #tpu.dot_dimension_numbers<[1], [0], [0], [1], [0, 0, 1, 1], [], []>} : vector<128x256xbf16>, vector<256x128xbf16>, vector<128x128xf32> -> vector<128x128xf32>
    %7 = arith.addf %3, %6 : vector<128x128xf32>
    %c0_6 = arith.constant 0 : index
    %c0_7 = arith.constant 0 : index
    %8 = vector.load %arg6[%c0_6, %c0_7] : memref<128x128xf32, #tpu.memory_space<vmem>>, vector<128x128xf32>
    tpu.vector_store %arg6[%c0_6, %c0_7], %7 {strides = array<i32>} : memref<128x128xf32, #tpu.memory_space<vmem>>, vector<128x128xf32>,
    %c0_i32_8 = arith.constant 0 : i32
    %9 = arith.cmpi eq, %arg1, %c0_i32_8 : i32
    %10 = arith.extui %9 : i1 to i32
    %c0_i32_9 = arith.constant 0 : i32
    %11 = arith.cmpi ne, %10, %c0_i32_9 : i32
    scf.if %11 {
      %c0_10 = arith.constant 0 : index
      %c0_11 = arith.constant 0 : index
      %12 = vector.load %arg6[%c0_10, %c0_11] : memref<128x128xf32, #tpu.memory_space<vmem>>, vector<128x128xf32>
      %cst_12 = arith.constant 0.000000e+00 : f32
      %13 = vector.broadcast %cst_12 : f32 to vector<128x128xf32>
      %14 = arith.maximumf %12, %13 : vector<128x128xf32>
      %15 = arith.truncf %14 : vector<128x128xf32> to vector<128x128xbf16>
      %c0_13 = arith.constant 0 : index
      %c0_14 = arith.constant 0 : index
      %16 = vector.load %arg5[%c0_13, %c0_14] : memref<128x128xbf16, #tpu.memory_space<vmem>>, vector<128x128xbf16>
      tpu.vector_store %arg5[%c0_13, %c0_14], %15 {strides = array<i32>} : memref<128x128xbf16, #tpu.memory_space<vmem>>, vector<128x128xbf16>,
    } else {
    }
    return
  }
  func.func @transform_0(%arg0: i32, %arg1: i32) -> (i32, i32) {
    %c0_i32 = arith.constant 0 : i32
    return %arg0, %arg1 : i32, i32
  }
  func.func @transform_1(%arg0: i32, %arg1: i32) -> (i32, i32) {
    %c0_i32 = arith.constant 0 : i32
    %c0_i32_0 = arith.constant 0 : i32
    return %arg1, %c0_i32 : i32, i32
  }
  func.func @transform_2(%arg0: i32, %arg1: i32) -> (i32, i32) {
    %c0_i32 = arith.constant 0 : i32
    %c0_i32_0 = arith.constant 0 : i32
    %c0_i32_1 = arith.constant 0 : i32
    return %c0_i32, %c0_i32_0 : i32, i32
  }
  func.func @transform_3(%arg0: i32, %arg1: i32) -> (i32, i32) {
    %c0_i32 = arith.constant 0 : i32
    %c0_i32_0 = arith.constant 0 : i32
    return %arg0, %c0_i32 : i32, i32
  }
}

</mosaic_0001>

<llo_original>
// kernel: my_model_forward.1
$region0: #{my_model_forward.1}
  #allocation0 [shape = 'u32[]', space=smem, size = 0x4, offset = 0x4, fixed_abs, tag = 'smem constant byte address 0x4 - core index']
  #allocation1 [shape = 'u32[72,128]{1,0:T(1,128)}', space=vmem, size = 0x9000, scoped, tag = 'internal scratch']
  #allocation2 [shape = 'f32[128,128]{1,0:T(8,128)}', space=vmem, size = 0x10000, scoped, tag = 'scratch operand']
  %s0 = inlined_call_operand.vmem [shape: bf16[256,256], index: 0, kind: input, shape index: {}]
  %s1 = inlined_call_operand.vmem [shape: bf16[256,128], index: 1, kind: input, shape index: {}]
  %s2 = inlined_call_operand.vmem [shape: f32[1,128], index: 2, kind: input, shape index: {}]
  %s3 = inlined_call_operand.vmem [shape: bf16[256,128], index: 3, kind: output, shape index: {}]
  %s4 = sld [smem:[#allocation0]]
  $region53: #{my_model_forward.1} parent=0
    _
  %s6 = ssub.s32 1, %s4
  %s7 = scalar_select 0, %s6, %s4
  loop: start=0, step=1, limit=4
  $region2: #{my_model_forward.1} parent=0 // loop_pre_header
    _
  $region3: #{my_model_forward.1} parent=0 // loop_header
    %s9 = sphi 0, %s13
    %p10 = scmp.ge.s32.totalorder %s9, 4
    %s16 = sphi 0, %s28
    %s17 = sphi 0, %s24
    %s18 = sphi 0, %s16
    %s19 = sphi 0, %s17
    %s20 = sphi 0, %s18
    %s21 = sphi 0, %s19
    %s33 = sphi 0, %s35
    %s36 = sphi 0, %s33
    %s37 = sphi 0, %s36
    %s53 = sphi 0, %s37
    %s59 = sphi 0, %s61
    %s62 = sphi 0, %s59
    %s63 = sphi 0, %s62
    %s79 = sphi 0, %s63
    %s83 = sphi 0, %s83
    %s85 = sphi 0, %s83
    %s86 = sphi 0, %s85
    %s100 = sphi 0, %s86
    %s106 = sphi 0, %s108
    %s109 = sphi 0, %s106
    %s110 = sphi 0, %s109
    %s126 = sphi 0, %s110
  $region4: #{my_model_forward.1} parent=0 // loop_header_branch
    %12 = sbr.rel (%p10) target = $region8
  $region5: #{my_model_forward.1} parent=0 // loop_body
    %s14 = ssub.s32 %s9, 1
    %s15 = ssub.s32 %s9, 2
    %s22 = sadd.s32 1, %s17
    %p23 = scmp.ge.s32.totalorder %s22, 1
    %s24 = scalar_select %p23, 0, %s22
    %s25 = sadd.s32 1, %s16
    %s26 = scalar_select %p23, %s25, %s16
    %p27 = scmp.ge.s32.totalorder %s26, 2
    %s28 = scalar_select %p27, 0, %s26
    %s29 = ssub.s32 %s16, %s28
    %s30 = ssub.s32 %s17, %s24
    %s31 = sor.u32 %s29, %s30
    %p32 = scmp.eq.s32.totalorder %s31, 0
    %s34 = sadd.s32 %s33, 1
    %s35 = scalar_select %p32, %s33, %s34
    %p38 = pneg %p32
    %p39 = scmp.eq.s32.totalorder %s9, 1
    %p40 = por %p38, %p39
    %p41 = scmp.ne.s32.totalorder %s33, %s36
    %p42 = scmp.eq.s32.totalorder %s9, 0
    %p43 = por %p41, %p42
    %p44 = scmp.ne.s32.totalorder %s33, %s36
    %p45 = scmp.eq.s32.totalorder %s14, 1
    %p46 = por %p44, %p45
    %p47 = scmp.ne.s32.totalorder %s36, %s37
    %p48 = scmp.eq.s32.totalorder %s14, 0
    %p49 = por %p47, %p48
    %p50 = scmp.ne.s32.totalorder %s36, %s37
    %p51 = scmp.eq.s32.totalorder %s15, 1
    %p52 = por %p50, %p51
    %p54 = scmp.ne.s32.totalorder %s37, %s53
    %p55 = scmp.eq.s32.totalorder %s15, 0
    %p56 = por %p54, %p55
    %s57 = ssub.s32 %s17, %s24
    %p58 = scmp.eq.s32.totalorder %s57, 0
    %s60 = sadd.s32 %s59, 1
    %s61 = scalar_select %p58, %s59, %s60
    %p64 = pneg %p58
    %p65 = scmp.eq.s32.totalorder %s9, 1
    %p66 = por %p64, %p65
    %p67 = scmp.ne.s32.totalorder %s59, %s62
    %p68 = scmp.eq.s32.totalorder %s9, 0
    %p69 = por %p67, %p68
    %p70 = scmp.ne.s32.totalorder %s59, %s62
    %p71 = scmp.eq.s32.totalorder %s14, 1
    %p72 = por %p70, %p71
    %p73 = scmp.ne.s32.totalorder %s62, %s63
    %p74 = scmp.eq.s32.totalorder %s14, 0
    %p75 = por %p73, %p74
    %p76 = scmp.ne.s32.totalorder %s62, %s63
    %p77 = scmp.eq.s32.totalorder %s15, 1
    %p78 = por %p76, %p77
    %p80 = scmp.ne.s32.totalorder %s63, %s79
    %p81 = scmp.eq.s32.totalorder %s15, 0
    %p82 = por %p80, %p81
    %s84 = sadd.s32 %s83, 1
    %p87 = scmp.eq.s32.totalorder %s9, 1
    %p88 = scmp.ne.s32.totalorder %s83, %s85
    %p89 = scmp.eq.s32.totalorder %s9, 0
    %p90 = por %p88, %p89
    %p91 = scmp.ne.s32.totalorder %s83, %s85
    %p92 = scmp.eq.s32.totalorder %s14, 1
    %p93 = por %p91, %p92
    %p94 = scmp.ne.s32.totalorder %s85, %s86
    %p95 = scmp.eq.s32.totalorder %s14, 0
    %p96 = por %p94, %p95
    %p97 = scmp.ne.s32.totalorder %s85, %s86
    %p98 = scmp.eq.s32.totalorder %s15, 1
    %p99 = por %p97, %p98
    %p101 = scmp.ne.s32.totalorder %s86, %s100
    %p102 = scmp.eq.s32.totalorder %s15, 0
    %p103 = por %p101, %p102
    %s104 = ssub.s32 %s16, %s28
    %p105 = scmp.eq.s32.totalorder %s104, 0
    %s107 = sadd.s32 %s106, 1
    %s108 = scalar_select %p105, %s106, %s107
    %p111 = pneg %p105
    %p112 = scmp.eq.s32.totalorder %s9, 1
    %p113 = por %p111, %p112
    %p114 = scmp.ne.s32.totalorder %s106, %s109
    %p115 = scmp.eq.s32.totalorder %s9, 0
    %p116 = por %p114, %p115
    %p117 = scmp.ne.s32.totalorder %s106, %s109
    %p118 = scmp.eq.s32.totalorder %s14, 1
    %p119 = por %p117, %p118
    %p120 = scmp.ne.s32.totalorder %s109, %s110
    %p121 = scmp.eq.s32.totalorder %s14, 0
    %p122 = por %p120, %p121
    %p123 = scmp.ne.s32.totalorder %s109, %s110
    %p124 = scmp.eq.s32.totalorder %s15, 1
    %p125 = por %p123, %p124
    %p127 = scmp.ne.s32.totalorder %s110, %s126
    %p128 = scmp.eq.s32.totalorder %s15, 0
    %p129 = por %p127, %p128
    %p130 = scmp.le.s32.totalorder 1, %s9
    %p131 = scmp.lt.s32.totalorder %s9, 3
    %p132 = pnand %p130, %p131
    %p133 = pneg %p132
    // Predicated region
    $region9: #{my_model_forward.1} parent=5 // pred_check
      _
    $region10: #{my_model_forward.1} parent=5 // pred_check_branch
      %135 = sbr.rel (%p132) target = $region12
    $region11: #{my_model_forward.1} parent=5 // pred_region
      %s136 = ssub.s32 %s9, 1
      // Predicated region
      $region13: #{my_model_forward.1} parent=11 // pred_check
        %p137 = pneg %p75
      $region14: #{my_model_forward.1} parent=11 // pred_check_branch
        %139 = sbr.rel (%p137) target = $region16
      $region15: #{my_model_forward.1} parent=11 // pred_region
        %s140 = smul.u32 32, %s19
        %p141 = scmp.lt.s32.totalorder %s140, 31
        %s142 = scalar_select %p141, %s140, 31
        %s143 = smul.addr %s142, 4
        %s144 = scalar_lea.vmem %s1, %s143
        %s145 = smul.u32 32, %s19
      $region16: #{my_model_forward.1} parent=11 // pred_fallthru
        _
      // Predicated region
      $region17: #{my_model_forward.1} parent=11 // pred_check
        %p146 = pneg %p96
      $region18: #{my_model_forward.1} parent=11 // pred_check_branch
        %148 = sbr.rel (%p146) target = $region20
      $region19: #{my_model_forward.1} parent=11 // pred_region
        _
      $region20: #{my_model_forward.1} parent=11 // pred_fallthru
        _
    $region12: #{my_model_forward.1} parent=5 // pred_fallthru
      _
    %p149 = scmp.lt.s32.totalorder %s9, 2
    // Predicated region
    $region21: #{my_model_forward.1} parent=5 // pred_check
      %p150 = pneg %p149
    $region22: #{my_model_forward.1} parent=5 // pred_check_branch
      %152 = sbr.rel (%p150) target = $region24
    $region23: #{my_model_forward.1} parent=5 // pred_region
      // Predicated region
      $region25: #{my_model_forward.1} parent=23 // pred_check
        %p153 = pneg %p43
      $region26: #{my_model_forward.1} parent=23 // pred_check_branch
        %155 = sbr.rel (%p153) target = $region28
      $region27: #{my_model_forward.1} parent=23 // pred_region
        %s156 = smul.u32 16, %s16
        %s157 = smul.u32 2, %s17
        %p158 = scmp.lt.s32.totalorder %s156, 31
        %s159 = scalar_select %p158, %s156, 31
        %p160 = scmp.lt.s32.totalorder %s157, 1
        %s161 = scalar_select %p160, %s157, 1
        %s162 = smul.addr %s159, 2
        %s163 = sadd.s32 %s161, %s162
        %s164 = smul.addr %s163, 4
        %s165 = scalar_lea.vmem %s0, %s164
        %s166 = smul.u32 16, %s16
        %s167 = smul.u32 2, %s17
      $region28: #{my_model_forward.1} parent=23 // pred_fallthru
        _
    $region24: #{my_model_forward.1} parent=5 // pred_fallthru
      _
    %p168 = scmp.le.s32.totalorder 1, %s9
    %p169 = scmp.lt.s32.totalorder %s9, 3
    %p170 = pnand %p168, %p169
    %p171 = pneg %p170
    // Predicated region
    $region29: #{my_model_forward.1} parent=5 // pred_check
      _
    $region30: #{my_model_forward.1} parent=5 // pred_check_branch
      %173 = sbr.rel (%p170) target = $region32
    $region31: #{my_model_forward.1} parent=5 // pred_region
      %s174 = ssub.s32 %s9, 1
      %s175 = smul.u32 16, %s18
      %s176 = smul.u32 2, %s19
      %p177 = scmp.lt.s32.totalorder %s175, 31
      %s178 = scalar_select %p177, %s175, 31
      %p179 = scmp.lt.s32.totalorder %s176, 1
      %s180 = scalar_select %p179, %s176, 1
      %s181 = smul.addr %s178, 2
      %s182 = sadd.s32 %s180, %s181
      %s183 = smul.addr %s182, 4
      %s184 = scalar_lea.vmem %s0, %s183
      %p185 = pneg %p49
      %p186 = pneg %p46
      %s187 = smul.u32 32, %s19
      %p188 = scmp.lt.s32.totalorder %s187, 31
      %s189 = scalar_select %p188, %s187, 31
      %s190 = smul.addr %s189, 4
      %s191 = scalar_lea.vmem %s1, %s190
      %p192 = pneg %p75
      %p193 = pneg %p72
      %p194 = pneg %p96
      %p195 = pneg %p93
      %p196 = pneg %p122
      %p197 = pneg %p119
      %s198 = smul.u32 16, %s18
      %p199 = scmp.lt.s32.totalorder %s198, 31
      %s200 = scalar_select %p199, %s198, 31
      %s201 = smul.addr %s200, 4
      %s202 = scalar_lea.vmem %s3, %s201
      %s203 = smul.u32 16, %s18
      %s204 = smul.u32 2, %s19
      %p205 = scmp.lt.s32.totalorder %s203, 31
      %s206 = scalar_select %p205, %s203, 31
      %p207 = scmp.lt.s32.totalorder %s204, 1
      %s208 = scalar_select %p207, %s204, 1
      %s209 = smul.addr %s206, 2
      %s210 = sadd.s32 %s208, %s209
      %s211 = smul.addr %s210, 4
      %s212 = scalar_lea.vmem %s0, %s211
      %s213 = smul.u32 16, %s18
      %s214 = smul.u32 2, %s19
      %s215 = smul.u32 32, %s19
      %p216 = scmp.lt.s32.totalorder %s215, 31
      %s217 = scalar_select %p216, %s215, 31
      %s218 = smul.addr %s217, 4
      %s219 = scalar_lea.vmem %s1, %s218
      %s220 = smul.u32 32, %s19
      %s221 = smul.u32 16, %s18
      %p222 = scmp.lt.s32.totalorder %s221, 31
      %s223 = scalar_select %p222, %s221, 31
      %s224 = smul.addr %s223, 4
      %s225 = scalar_lea.vmem %s3, %s224
      %s226 = smul.u32 16, %s18
      %p227 = scmp.eq.s32.totalorder %s19, 0
      // Predicated region
      $region33: #{my_model_forward.1} parent=31 // pred_check
        %p228 = pneg %p227
      $region34: #{my_model_forward.1} parent=31 // pred_check_branch
        %230 = sbr.rel (%p228) target = $region36
      $region35: #{my_model_forward.1} parent=31 // pred_region
        %v231 = vld [vmem:[%s2] sm:$0x1]
        %v233 = vperm.slane %v231, 0
        %235 = vst [vmem:[#allocation2] sm:$0xff] %v233
        %236 = vst [vmem:[#allocation2 + $0x8] sm:$0xff] %v233
        %237 = vst [vmem:[#allocation2 + $0x10] sm:$0xff] %v233
        %238 = vst [vmem:[#allocation2 + $0x18] sm:$0xff] %v233
        %239 = vst [vmem:[#allocation2 + $0x20] sm:$0xff] %v233
        %240 = vst [vmem:[#allocation2 + $0x28] sm:$0xff] %v233
        %241 = vst [vmem:[#allocation2 + $0x30] sm:$0xff] %v233
        %242 = vst [vmem:[#allocation2 + $0x38] sm:$0xff] %v233
        %243 = vst [vmem:[#allocation2 + $0x40] sm:$0xff] %v233
        %244 = vst [vmem:[#allocation2 + $0x48] sm:$0xff] %v233
        %245 = vst [vmem:[#allocation2 + $0x50] sm:$0xff] %v233
        %246 = vst [vmem:[#allocation2 + $0x58] sm:$0xff] %v233
        %247 = vst [vmem:[#allocation2 + $0x60] sm:$0xff] %v233
        %248 = vst [vmem:[#allocation2 + $0x68] sm:$0xff] %v233
        %249 = vst [vmem:[#allocation2 + $0x70] sm:$0xff] %v233
        %250 = vst [vmem:[#allocation2 + $0x78] sm:$0xff] %v233
      $region36: #{my_model_forward.1} parent=31 // pred_fallthru
        _
      %v251 = vld [vmem:[#allocation2] sm:$0xff]
      %v252 = vld [vmem:[#allocation2 + $0x8] sm:$0xff]
      %v253 = vld [vmem:[#allocation2 + $0x10] sm:$0xff]
      %v254 = vld [vmem:[#allocation2 + $0x18] sm:$0xff]
      %v255 = vld [vmem:[#allocation2 + $0x20] sm:$0xff]
      %v256 = vld [vmem:[#allocation2 + $0x28] sm:$0xff]
      %v257 = vld [vmem:[#allocation2 + $0x30] sm:$0xff]
      %v258 = vld [vmem:[#allocation2 + $0x38] sm:$0xff]
      %v259 = vld [vmem:[#allocation2 + $0x40] sm:$0xff]
      %v260 = vld [vmem:[#allocation2 + $0x48] sm:$0xff]
      %v261 = vld [vmem:[#allocation2 + $0x50] sm:$0xff]
      %v262 = vld [vmem:[#allocation2 + $0x58] sm:$0xff]
      %v263 = vld [vmem:[#allocation2 + $0x60] sm:$0xff]
      %v264 = vld [vmem:[#allocation2 + $0x68] sm:$0xff]
      %v265 = vld [vmem:[#allocation2 + $0x70] sm:$0xff]
      %v266 = vld [vmem:[#allocation2 + $0x78] sm:$0xff]
      %v267 = vld [vmem:[%s212] sm:$0xff]
      %v268 = vld [vmem:[%s212 + $0x8] sm:$0xff]
      %v269 = vld [vmem:[%s212 + $0x10] sm:$0xff]
      %v270 = vld [vmem:[%s212 + $0x18] sm:$0xff]
      %v271 = vld [vmem:[%s212 + $0x20] sm:$0xff]
      %v272 = vld [vmem:[%s212 + $0x28] sm:$0xff]
      %v273 = vld [vmem:[%s212 + $0x30] sm:$0xff]
      %v274 = vld [vmem:[%s212 + $0x38] sm:$0xff]
      %v275 = vld [vmem:[%s212 + $0x40] sm:$0xff]
      %v276 = vld [vmem:[%s212 + $0x48] sm:$0xff]
      %v277 = vld [vmem:[%s212 + $0x50] sm:$0xff]
      %v278 = vld [vmem:[%s212 + $0x58] sm:$0xff]
      %v279 = vld [vmem:[%s212 + $0x60] sm:$0xff]
      %v280 = vld [vmem:[%s212 + $0x68] sm:$0xff]
      %v281 = vld [vmem:[%s212 + $0x70] sm:$0xff]
      %v282 = vld [vmem:[%s212 + $0x78] sm:$0xff]
      %v283 = vld [vmem:[%s219] sm:$0xf]
      %v284 = vld [vmem:[%s219 + $0x4] sm:$0xf]
      %v285 = vld [vmem:[%s219 + $0x8] sm:$0xf]
      %v286 = vld [vmem:[%s219 + $0xc] sm:$0xf]
      %v287 = vld [vmem:[%s219 + $0x10] sm:$0xf]
      %v288 = vld [vmem:[%s219 + $0x14] sm:$0xf]
      %v289 = vld [vmem:[%s219 + $0x18] sm:$0xf]
      %v290 = vld [vmem:[%s219 + $0x1c] sm:$0xf]
      %v291 = vld [vmem:[%s219 + $0x20] sm:$0xf]
      %v292 = vld [vmem:[%s219 + $0x24] sm:$0xf]
      %v293 = vld [vmem:[%s219 + $0x28] sm:$0xf]
      %v294 = vld [vmem:[%s219 + $0x2c] sm:$0xf]
      %v295 = vld [vmem:[%s219 + $0x30] sm:$0xf]
      %v296 = vld [vmem:[%s219 + $0x34] sm:$0xf]
      %v297 = vld [vmem:[%s219 + $0x38] sm:$0xf]
      %v298 = vld [vmem:[%s219 + $0x3c] sm:$0xf]
      %v299 = vld [vmem:[%s219 + $0x40] sm:$0xf]
      %v300 = vld [vmem:[%s219 + $0x44] sm:$0xf]
      %v301 = vld [vmem:[%s219 + $0x48] sm:$0xf]
      %v302 = vld [vmem:[%s219 + $0x4c] sm:$0xf]
      %v303 = vld [vmem:[%s219 + $0x50] sm:$0xf]
      %v304 = vld [vmem:[%s219 + $0x54] sm:$0xf]
      %v305 = vld [vmem:[%s219 + $0x58] sm:$0xf]
      %v306 = vld [vmem:[%s219 + $0x5c] sm:$0xf]
      %v307 = vld [vmem:[%s219 + $0x60] sm:$0xf]
      %v308 = vld [vmem:[%s219 + $0x64] sm:$0xf]
      %v309 = vld [vmem:[%s219 + $0x68] sm:$0xf]
      %v310 = vld [vmem:[%s219 + $0x6c] sm:$0xf]
      %v311 = vld [vmem:[%s219 + $0x70] sm:$0xf]
      %v312 = vld [vmem:[%s219 + $0x74] sm:$0xf]
      %v313 = vld [vmem:[%s219 + $0x78] sm:$0xf]
      %v314 = vld [vmem:[%s219 + $0x7c] sm:$0xf]
      %v331 = vunpack.c.l.b16 %v267
      %v332 = vunpack.c.h.b16 %v267
      %v333 = vunpack.c.l.b16 %v268
      %v334 = vunpack.c.h.b16 %v268
      %v335 = vunpack.c.l.b16 %v269
      %v336 = vunpack.c.h.b16 %v269
      %v337 = vunpack.c.l.b16 %v270
      %v338 = vunpack.c.h.b16 %v270
      %v339 = vunpack.c.l.b16 %v271
      %v340 = vunpack.c.h.b16 %v271
      %v341 = vunpack.c.l.b16 %v272
      %v342 = vunpack.c.h.b16 %v272
      %v343 = vunpack.c.l.b16 %v273
      %v344 = vunpack.c.h.b16 %v273
      %v345 = vunpack.c.l.b16 %v274
      %v346 = vunpack.c.h.b16 %v274
      %v347 = vunpack.c.l.b16 %v275
      %v348 = vunpack.c.h.b16 %v275
      %v349 = vunpack.c.l.b16 %v276
      %v350 = vunpack.c.h.b16 %v276
      %v351 = vunpack.c.l.b16 %v277
      %v352 = vunpack.c.h.b16 %v277
      %v353 = vunpack.c.l.b16 %v278
      %v354 = vunpack.c.h.b16 %v278
      %v355 = vunpack.c.l.b16 %v279
      %v356 = vunpack.c.h.b16 %v279
      %v357 = vunpack.c.l.b16 %v280
      %v358 = vunpack.c.h.b16 %v280
      %v359 = vunpack.c.l.b16 %v281
      %v360 = vunpack.c.h.b16 %v281
      %v361 = vunpack.c.l.b16 %v282
      %v362 = vunpack.c.h.b16 %v282
      %v363 = vpack.c.b16 %v333, %v331
      %v364 = vpack.c.b16 %v334, %v332
      %v365 = vpack.c.b16 %v337, %v335
      %v366 = vpack.c.b16 %v338, %v336
      %v367 = vpack.c.b16 %v341, %v339
      %v368 = vpack.c.b16 %v342, %v340
      %v369 = vpack.c.b16 %v345, %v343
      %v370 = vpack.c.b16 %v346, %v344
      %v371 = vpack.c.b16 %v349, %v347
      %v372 = vpack.c.b16 %v350, %v348
      %v373 = vpack.c.b16 %v353, %v351
      %v374 = vpack.c.b16 %v354, %v352
      %v375 = vpack.c.b16 %v357, %v355
      %v376 = vpack.c.b16 %v358, %v356
      %v377 = vpack.c.b16 %v361, %v359
      %v378 = vpack.c.b16 %v362, %v360
      %v427 = vunpack.c.l.b16 %v283
      %v428 = vunpack.c.l.b16 %v284
      %v429 = vunpack.c.l.b16 %v285
      %v430 = vunpack.c.l.b16 %v286
      %v431 = vunpack.c.l.b16 %v287
      %v432 = vunpack.c.l.b16 %v288
      %v433 = vunpack.c.l.b16 %v289
      %v434 = vunpack.c.l.b16 %v290
      %v435 = vunpack.c.l.b16 %v291
      %v436 = vunpack.c.l.b16 %v292
      %v437 = vunpack.c.l.b16 %v293
      %v438 = vunpack.c.l.b16 %v294
      %v439 = vunpack.c.l.b16 %v295
      %v440 = vunpack.c.l.b16 %v296
      %v441 = vunpack.c.l.b16 %v297
      %v442 = vunpack.c.l.b16 %v298
      %v443 = vunpack.c.l.b16 %v299
      %v444 = vunpack.c.l.b16 %v300
      %v445 = vunpack.c.l.b16 %v301
      %v446 = vunpack.c.l.b16 %v302
      %v447 = vunpack.c.l.b16 %v303
      %v448 = vunpack.c.l.b16 %v304
      %v449 = vunpack.c.l.b16 %v305
      %v450 = vunpack.c.l.b16 %v306
      %v451 = vunpack.c.l.b16 %v307
      %v452 = vunpack.c.l.b16 %v308
      %v453 = vunpack.c.l.b16 %v309
      %v454 = vunpack.c.l.b16 %v310
      %v455 = vunpack.c.l.b16 %v311
      %v456 = vunpack.c.l.b16 %v312
      %v457 = vunpack.c.l.b16 %v313
      %v458 = vunpack.c.l.b16 %v314
      %v459 = vpack.c.b16 %v428, %v427
      %v460 = vpack.c.b16 %v430, %v429
      %v461 = vpack.c.b16 %v432, %v431
      %v462 = vpack.c.b16 %v434, %v433
      %v463 = vpack.c.b16 %v436, %v435
      %v464 = vpack.c.b16 %v438, %v437
      %v465 = vpack.c.b16 %v440, %v439
      %v466 = vpack.c.b16 %v442, %v441
      %v467 = vpack.c.b16 %v444, %v443
      %v468 = vpack.c.b16 %v446, %v445
      %v469 = vpack.c.b16 %v448, %v447
      %v470 = vpack.c.b16 %v450, %v449
      %v471 = vpack.c.b16 %v452, %v451
      %v472 = vpack.c.b16 %v454, %v453
      %v473 = vpack.c.b16 %v456, %v455
      %v474 = vpack.c.b16 %v458, %v457
      %491 = vmatpush.bf16.msra.mxu0 %v466
      %492 = vmatpush.bf16.msra.mxu0 %v465
      %493 = vmatpush.bf16.msra.mxu0 %v464
      %494 = vmatpush.bf16.msra.mxu0 %v463
      %495 = vmatpush.bf16.msra.mxu0 %v462
      %496 = vmatpush.bf16.msra.mxu0 %v461
      %497 = vmatpush.bf16.msra.mxu0 %v460
      %498 = vmatpush.bf16.msra.mxu0 %v459
      %499 = vmatmul.bf16.gmra.mxu0 %v363
      %v500 = vpop.f32.mrf.mxu0
      %v501 = vadd.f32 0.0, %v500
      %v502 = vpop.f32.mrf.mxu0
      %v503 = vadd.f32 0.0, %v502
      %504 = vmatmul.bf16.gmra.mxu0 %v365
      %v505 = vpop.f32.mrf.mxu0
      %v506 = vadd.f32 0.0, %v505
      %v507 = vpop.f32.mrf.mxu0
      %v508 = vadd.f32 0.0, %v507
      %509 = vmatmul.bf16.gmra.mxu0 %v367
      %v510 = vpop.f32.mrf.mxu0
      %v511 = vadd.f32 0.0, %v510
      %v512 = vpop.f32.mrf.mxu0
      %v513 = vadd.f32 0.0, %v512
      %514 = vmatmul.bf16.gmra.mxu0 %v369
      %v515 = vpop.f32.mrf.mxu0
      %v516 = vadd.f32 0.0, %v515
      %v517 = vpop.f32.mrf.mxu0
      %v518 = vadd.f32 0.0, %v517
      %519 = vmatmul.bf16.gmra.mxu0 %v371
      %v520 = vpop.f32.mrf.mxu0
      %v521 = vadd.f32 0.0, %v520
      %v522 = vpop.f32.mrf.mxu0
      %v523 = vadd.f32 0.0, %v522
      %524 = vmatmul.bf16.gmra.mxu0 %v373
      %v525 = vpop.f32.mrf.mxu0
      %v526 = vadd.f32 0.0, %v525
      %v527 = vpop.f32.mrf.mxu0
      %v528 = vadd.f32 0.0, %v527
      %529 = vmatmul.bf16.gmra.mxu0 %v375
      %v530 = vpop.f32.mrf.mxu0
      %v531 = vadd.f32 0.0, %v530
      %v532 = vpop.f32.mrf.mxu0
      %v533 = vadd.f32 0.0, %v532
      %534 = vmatmul.bf16.gmra.mxu0 %v377
      %v535 = vpop.f32.mrf.mxu0
      %v536 = vadd.f32 0.0, %v535
      %v537 = vpop.f32.mrf.mxu0
      %v538 = vadd.f32 0.0, %v537
      %539 = vdwg.mxu0
      %540 = vmatpush.bf16.msra.mxu0 %v474
      %541 = vmatpush.bf16.msra.mxu0 %v473
      %542 = vmatpush.bf16.msra.mxu0 %v472
      %543 = vmatpush.bf16.msra.mxu0 %v471
      %544 = vmatpush.bf16.msra.mxu0 %v470
      %545 = vmatpush.bf16.msra.mxu0 %v469
      %546 = vmatpush.bf16.msra.mxu0 %v468
      %547 = vmatpush.bf16.msra.mxu0 %v467
      %548 = vmatmul.bf16.gmra.mxu0 %v364
      %v549 = vpop.f32.mrf.mxu0
      %v550 = vadd.f32 %v501, %v549
      %v551 = vpop.f32.mrf.mxu0
      %v552 = vadd.f32 %v503, %v551
      %553 = vmatmul.bf16.gmra.mxu0 %v366
      %v554 = vpop.f32.mrf.mxu0
      %v555 = vadd.f32 %v506, %v554
      %v556 = vpop.f32.mrf.mxu0
      %v557 = vadd.f32 %v508, %v556
      %558 = vmatmul.bf16.gmra.mxu0 %v368
      %v559 = vpop.f32.mrf.mxu0
      %v560 = vadd.f32 %v511, %v559
      %v561 = vpop.f32.mrf.mxu0
      %v562 = vadd.f32 %v513, %v561
      %563 = vmatmul.bf16.gmra.mxu0 %v370
      %v564 = vpop.f32.mrf.mxu0
      %v565 = vadd.f32 %v516, %v564
      %v566 = vpop.f32.mrf.mxu0
      %v567 = vadd.f32 %v518, %v566
      %568 = vmatmul.bf16.gmra.mxu0 %v372
      %v569 = vpop.f32.mrf.mxu0
      %v570 = vadd.f32 %v521, %v569
      %v571 = vpop.f32.mrf.mxu0
      %v572 = vadd.f32 %v523, %v571
      %573 = vmatmul.bf16.gmra.mxu0 %v374
      %v574 = vpop.f32.mrf.mxu0
      %v575 = vadd.f32 %v526, %v574
      %v576 = vpop.f32.mrf.mxu0
      %v577 = vadd.f32 %v528, %v576
      %578 = vmatmul.bf16.gmra.mxu0 %v376
      %v579 = vpop.f32.mrf.mxu0
      %v580 = vadd.f32 %v531, %v579
      %v581 = vpop.f32.mrf.mxu0
      %v582 = vadd.f32 %v533, %v581
      %583 = vmatmul.bf16.gmra.mxu0 %v378
      %v584 = vpop.f32.mrf.mxu0
      %v585 = vadd.f32 %v536, %v584
      %v586 = vpop.f32.mrf.mxu0
      %v587 = vadd.f32 %v538, %v586
      %588 = vdwg.mxu0
      %v589 = vadd.f32 %v251, %v550
      %v590 = vadd.f32 %v252, %v552
      %v591 = vadd.f32 %v253, %v555
      %v592 = vadd.f32 %v254, %v557
      %v593 = vadd.f32 %v255, %v560
      %v594 = vadd.f32 %v256, %v562
      %v595 = vadd.f32 %v257, %v565
      %v596 = vadd.f32 %v258, %v567
      %v597 = vadd.f32 %v259, %v570
      %v598 = vadd.f32 %v260, %v572
      %v599 = vadd.f32 %v261, %v575
      %v600 = vadd.f32 %v262, %v577
      %v601 = vadd.f32 %v263, %v580
      %v602 = vadd.f32 %v264, %v582
      %v603 = vadd.f32 %v265, %v585
      %v604 = vadd.f32 %v266, %v587
      %605 = vst [vmem:[#allocation2] sm:$0xff] %v589
      %606 = vst [vmem:[#allocation2 + $0x8] sm:$0xff] %v590
      %607 = vst [vmem:[#allocation2 + $0x10] sm:$0xff] %v591
      %608 = vst [vmem:[#allocation2 + $0x18] sm:$0xff] %v592
      %609 = vst [vmem:[#allocation2 + $0x20] sm:$0xff] %v593
      %610 = vst [vmem:[#allocation2 + $0x28] sm:$0xff] %v594
      %611 = vst [vmem:[#allocation2 + $0x30] sm:$0xff] %v595
      %612 = vst [vmem:[#allocation2 + $0x38] sm:$0xff] %v596
      %613 = vst [vmem:[#allocation2 + $0x40] sm:$0xff] %v597
      %614 = vst [vmem:[#allocation2 + $0x48] sm:$0xff] %v598
      %615 = vst [vmem:[#allocation2 + $0x50] sm:$0xff] %v599
      %616 = vst [vmem:[#allocation2 + $0x58] sm:$0xff] %v600
      %617 = vst [vmem:[#allocation2 + $0x60] sm:$0xff] %v601
      %618 = vst [vmem:[#allocation2 + $0x68] sm:$0xff] %v602
      %619 = vst [vmem:[#allocation2 + $0x70] sm:$0xff] %v603
      %620 = vst [vmem:[#allocation2 + $0x78] sm:$0xff] %v604
      // Predicated region
      $region37: #{my_model_forward.1} parent=31 // pred_check
        %p621 = pneg %p227
      $region38: #{my_model_forward.1} parent=31 // pred_check_branch
        %623 = sbr.rel (%p621) target = $region40
      $region39: #{my_model_forward.1} parent=31 // pred_region
        %v624 = vld [vmem:[#allocation2] sm:$0xff]
        %v625 = vld [vmem:[#allocation2 + $0x8] sm:$0xff]
        %v626 = vld [vmem:[#allocation2 + $0x10] sm:$0xff]
        %v627 = vld [vmem:[#allocation2 + $0x18] sm:$0xff]
        %v628 = vld [vmem:[#allocation2 + $0x20] sm:$0xff]
        %v629 = vld [vmem:[#allocation2 + $0x28] sm:$0xff]
        %v630 = vld [vmem:[#allocation2 + $0x30] sm:$0xff]
        %v631 = vld [vmem:[#allocation2 + $0x38] sm:$0xff]
        %v632 = vld [vmem:[#allocation2 + $0x40] sm:$0xff]
        %v633 = vld [vmem:[#allocation2 + $0x48] sm:$0xff]
        %v634 = vld [vmem:[#allocation2 + $0x50] sm:$0xff]
        %v635 = vld [vmem:[#allocation2 + $0x58] sm:$0xff]
        %v636 = vld [vmem:[#allocation2 + $0x60] sm:$0xff]
        %v637 = vld [vmem:[#allocation2 + $0x68] sm:$0xff]
        %v638 = vld [vmem:[#allocation2 + $0x70] sm:$0xff]
        %v639 = vld [vmem:[#allocation2 + $0x78] sm:$0xff]
        %v640 = vmax.f32 %v624, 0.0
        %v641 = vmax.f32 %v625, 0.0
        %v642 = vmax.f32 %v626, 0.0
        %v643 = vmax.f32 %v627, 0.0
        %v644 = vmax.f32 %v628, 0.0
        %v645 = vmax.f32 %v629, 0.0
        %v646 = vmax.f32 %v630, 0.0
        %v647 = vmax.f32 %v631, 0.0
        %v648 = vmax.f32 %v632, 0.0
        %v649 = vmax.f32 %v633, 0.0
        %v650 = vmax.f32 %v634, 0.0
        %v651 = vmax.f32 %v635, 0.0
        %v652 = vmax.f32 %v636, 0.0
        %v653 = vmax.f32 %v637, 0.0
        %v654 = vmax.f32 %v638, 0.0
        %v655 = vmax.f32 %v639, 0.0
        %v656 = vpack.c.bf16 %v640, %v640
        %v657 = vpack.c.bf16 %v641, %v641
        %v658 = vpack.c.bf16 %v642, %v642
        %v659 = vpack.c.bf16 %v643, %v643
        %v660 = vpack.c.bf16 %v644, %v644
        %v661 = vpack.c.bf16 %v645, %v645
        %v662 = vpack.c.bf16 %v646, %v646
        %v663 = vpack.c.bf16 %v647, %v647
        %v664 = vpack.c.bf16 %v648, %v648
        %v665 = vpack.c.bf16 %v649, %v649
        %v666 = vpack.c.bf16 %v650, %v650
        %v667 = vpack.c.bf16 %v651, %v651
        %v668 = vpack.c.bf16 %v652, %v652
        %v669 = vpack.c.bf16 %v653, %v653
        %v670 = vpack.c.bf16 %v654, %v654
        %v671 = vpack.c.bf16 %v655, %v655
        %672 = vst [vmem:[%s225] sm:$0xf] %v656
        %673 = vst [vmem:[%s225 + $0x4] sm:$0xf] %v657
        %674 = vst [vmem:[%s225 + $0x8] sm:$0xf] %v658
        %675 = vst [vmem:[%s225 + $0xc] sm:$0xf] %v659
        %676 = vst [vmem:[%s225 + $0x10] sm:$0xf] %v660
        %677 = vst [vmem:[%s225 + $0x14] sm:$0xf] %v661
        %678 = vst [vmem:[%s225 + $0x18] sm:$0xf] %v662
        %679 = vst [vmem:[%s225 + $0x1c] sm:$0xf] %v663
        %680 = vst [vmem:[%s225 + $0x20] sm:$0xf] %v664
        %681 = vst [vmem:[%s225 + $0x24] sm:$0xf] %v665
        %682 = vst [vmem:[%s225 + $0x28] sm:$0xf] %v666
        %683 = vst [vmem:[%s225 + $0x2c] sm:$0xf] %v667
        %684 = vst [vmem:[%s225 + $0x30] sm:$0xf] %v668
        %685 = vst [vmem:[%s225 + $0x34] sm:$0xf] %v669
        %686 = vst [vmem:[%s225 + $0x38] sm:$0xf] %v670
        %687 = vst [vmem:[%s225 + $0x3c] sm:$0xf] %v671
      $region40: #{my_model_forward.1} parent=31 // pred_fallthru
        _
      %s688 = smul.u32 16, %s18
      %p689 = scmp.lt.s32.totalorder %s688, 31
      %s690 = scalar_select %p689, %s688, 31
      %s691 = smul.addr %s690, 4
      %s692 = scalar_lea.vmem %s3, %s691
      // Predicated region
      $region41: #{my_model_forward.1} parent=31 // pred_check
        %p693 = pneg %p119
      $region42: #{my_model_forward.1} parent=31 // pred_check_branch
        %695 = sbr.rel (%p693) target = $region44
      $region43: #{my_model_forward.1} parent=31 // pred_region
        %s696 = smul.u32 16, %s18
      $region44: #{my_model_forward.1} parent=31 // pred_fallthru
        _
    $region32: #{my_model_forward.1} parent=5 // pred_fallthru
      _
    %p697 = scmp.le.s32.totalorder 2, %s9
    // Predicated region
    $region45: #{my_model_forward.1} parent=5 // pred_check
      %p698 = pneg %p697
    $region46: #{my_model_forward.1} parent=5 // pred_check_branch
      %700 = sbr.rel (%p698) target = $region48
    $region47: #{my_model_forward.1} parent=5 // pred_region
      %s701 = ssub.s32 %s9, 2
      // Predicated region
      $region49: #{my_model_forward.1} parent=47 // pred_check
        %p702 = pneg %p125
      $region50: #{my_model_forward.1} parent=47 // pred_check_branch
        %704 = sbr.rel (%p702) target = $region52
      $region51: #{my_model_forward.1} parent=47 // pred_region
        %s705 = smul.u32 16, %s20
        %p706 = scmp.lt.s32.totalorder %s705, 31
        %s707 = scalar_select %p706, %s705, 31
        %s708 = smul.addr %s707, 4
        %s709 = scalar_lea.vmem %s3, %s708
      $region52: #{my_model_forward.1} parent=47 // pred_fallthru
        _
    $region48: #{my_model_forward.1} parent=5 // pred_fallthru
      _
  $region6: #{my_model_forward.1} parent=0 // loop_footer
    %s13 = sadd.s32 1, %s9
  $region7: #{my_model_forward.1} parent=0 // loop_footer_branch
    %8 = sbr.rel target = $region3
  $region8: #{my_model_forward.1} parent=0 // loop_exit
    _

</llo_original>
